<compile_context>
chip_gen: v6e
topology: v6e:2x2x1
jax: 0.10.0
libtpu: 0.0.40
codegen_flags: <defaults>
</compile_context>

<pallas_src>
import functools

import jax
import jax.numpy as jnp
from jax.experimental import pallas as pl
from jax.experimental.pallas import tpu as pltpu


def _round_up(x, m):
    return ((x + m - 1) // m) * m


def _tpu_defaults():
    """Per-generation (num_splits, vmem_budget_bytes) for tile sizing."""
    try:
        kind = jax.devices()[0].device_kind.lower()
    except Exception:
        kind = ""
    if "7" in kind:            # v7x: 2 TensorCores, only 64 MiB VMEM per TC
        return 2, 24 * (1 << 20)
    if "v5" in kind:           # v5e/v5p: 1 TC, 16 MiB default scoped VMEM
        return 1, 14 * (1 << 20)
    return 1, 24 * (1 << 20)   # v6e / unknown: 1 TC, 32 MiB default scoped VMEM


def _pick_tile_n(K, N, vmem_budget_bytes):
    """Largest lane-aligned tile that keeps double-buffered tiles in budget."""
    # bytes per sample column, double-buffered: bf16 spline slab (2K rows),
    # f32 vecs (3 rows), plus the f32 accumulator lane.
    per_col = 2 * (2 * K) * 2 + 2 * 3 * 4 + 4
    cap = max(512, (vmem_budget_bytes // per_col) // 512 * 512)
    tile_n = min(8192, cap)
    # Don't stream pure padding when N is small.
    tile_n = min(tile_n, _round_up(max(N, 512), 512))
    return tile_n


def _se_loss_kernel(theta_t_ref, splines_t_ref, vecs_ref, out_ref, acc_ref, *,
                    inv_n):
    j = pl.program_id(1)                       # reduction step within this split

    @pl.when(j == 0)
    def _init():
        acc_ref[...] = jnp.zeros_like(acc_ref)

    # Fused bf16 x bf16 -> f32 MXU matmul, transposed so samples sit on the
    # lane axis:  (2, 2K) @ (2K, TILE_N) -> (2, TILE_N); row 0 = a^T, row 1 = a'^T.
    a_both = jnp.dot(theta_t_ref[...], splines_t_ref[...],
                     preferred_element_type=jnp.float32)
    a = a_both[0:1, :]
    a_d = a_both[1:2, :]

    vecs = vecs_ref[...]                       # (3, TILE_N), lane-dense, f32
    zb = vecs[0:1, :]                          # z - b           (precomputed)
    phi = vecs[1:2, :]                         # Phi
    dh = vecs[2:3, :]                          # delta / H       (precomputed)

    info = (zb - a) * phi - a_d * dh           # (1, TILE_N)
    acc_ref[...] += info * info                # per-lane partial sums

    @pl.when(j == pl.num_programs(1) - 1)
    def _finalize():
        # This split's contribution, already divided by the TRUE sample count.
        part = jnp.sum(acc_ref[...]) * inv_n
        out_ref[...] = jnp.full(out_ref.shape, part, dtype=out_ref.dtype)


def make_se_loss_fn(z, delta, Phi, H_t_derivatives, t_splines,
                    t_spline_derivatives, b, *, tile_n=None, num_splits=None):
    """Hoists all layout work once; returns a jitted loss(theta) -> scalar."""
    N, K = t_splines.shape
    f32, bf16 = jnp.float32, jnp.bfloat16
    two_k = 2 * K

    auto_splits, vmem_budget = _tpu_defaults()
    if num_splits is None:
        num_splits = auto_splits
    if tile_n is None:
        tile_n = _pick_tile_n(K, N, vmem_budget)
    if N <= tile_n:
        num_splits = 1        # a second split would stream 100% padding

    # ---- static layout plumbing (done ONCE; only theta changes per step) ----
    # Fused + transposed spline slab, bf16: (2K, N) -> samples on the lane axis.
    splines_t = jnp.concatenate(
        [t_splines, t_spline_derivatives], axis=1).T.astype(bf16)      # (2K, N)
    # Lane-dense per-sample side data, 3 rows (zb, Phi, delta/H), f32.
    vecs = jnp.stack([
        (z - b).reshape(N),
        Phi.reshape(N),
        (delta / H_t_derivatives).reshape(N),
    ], axis=0).astype(f32)                                             # (3, N)

    # Pad N so it splits evenly into num_splits * tiles of tile_n (lane-aligned).
    chunk = num_splits * tile_n
    n_pad = _round_up(N, chunk)
    if n_pad != N:
        # Zero padding is exact: Phi = delta/H = 0 in the pad -> info = 0.
        splines_t = jnp.pad(splines_t, ((0, 0), (0, n_pad - N)))
        vecs = jnp.pad(vecs, ((0, 0), (0, n_pad - N)))
    tiles_per_split = n_pad // chunk

    kernel = functools.partial(_se_loss_kernel, inv_n=1.0 / N)

    pallas_fn = pl.pallas_call(
        kernel,
        out_shape=jax.ShapeDtypeStruct((num_splits, 1, 128), f32),
        grid_spec=pltpu.PrefetchScalarGridSpec(
            num_scalar_prefetch=0,
            grid=(num_splits, tiles_per_split),
            in_specs=[
                # theta^T block-diag: resident, same block every step.
                pl.BlockSpec((2, two_k), lambda c, j: (0, 0)),
                # Fused bf16 spline slab: one (2K, TILE_N) tile per step;
                # each split gets a contiguous half of N (v7x megacore).
                pl.BlockSpec((two_k, tile_n),
                             lambda c, j: (0, c * tiles_per_split + j)),
                # Stacked per-sample vectors: (3, TILE_N) tile per step.
                pl.BlockSpec((3, tile_n),
                             lambda c, j: (0, c * tiles_per_split + j)),
            ],
            out_specs=pl.BlockSpec((1, 1, 128), lambda c, j: (c, 0, 0)),
            scratch_shapes=[pltpu.VMEM((1, tile_n), f32)],
        ),
        compiler_params=pltpu.CompilerParams(
            dimension_semantics=("parallel", "arbitrary")),
        cost_estimate=pl.CostEstimate(
            flops=2 * 2 * two_k * n_pad + 6 * n_pad,
            transcendentals=0,
            bytes_accessed=(two_k * n_pad * 2 + 3 * n_pad * 4
                            + 2 * two_k * 2 + num_splits * 128 * 4)),
    )

    th_zeros = jnp.zeros((K,), bf16)

    def loss(theta):
        # Block-diagonal theta, transposed, bf16: row 0 -> a, row 1 -> a'.
        th = theta.reshape(K).astype(bf16)
        theta_t = jnp.stack([jnp.concatenate([th, th_zeros]),
                             jnp.concatenate([th_zeros, th])], axis=0)  # (2, 2K)
        out = pallas_fn(theta_t, splines_t, vecs)
        # Each split's partial is broadcast over its 128-lane row; sum lane 0.
        return jnp.sum(out[:, 0, 0])

    return jax.jit(loss)


def se_loss(z, delta, Phi, H_t_derivatives, t_splines, t_spline_derivatives,
            b, theta, **kwargs):
    """One-shot convenience wrapper (prepare + call)."""
    return make_se_loss_fn(z, delta, Phi, H_t_derivatives, t_splines,
                           t_spline_derivatives, b, **kwargs)(theta)


# ----------------------------- references ----------------------------------
def _reference(z, delta, Phi, H_t_derivatives, t_splines, t_spline_derivatives,
               b, theta):
    hi = jax.lax.Precision.HIGHEST
    a = jnp.dot(t_splines, theta, precision=hi)
    a_d = jnp.dot(t_spline_derivatives, theta, precision=hi)
    info = (z - a - b) * Phi - delta * a_d / H_t_derivatives
    return jnp.sum(info ** 2) / z.shape[0]


def _reference_bf16(z, delta, Phi, H_t_derivatives, t_splines,
                    t_spline_derivatives, b, theta):
    # Same math, but with the spline slabs / theta rounded to bf16 exactly as
    # the kernel sees them (f32 everywhere else) -> tight correctness target.
    r = lambda x: x.astype(jnp.bfloat16).astype(jnp.float32)
    return _reference(z, delta, Phi, H_t_derivatives, r(t_splines),
                      r(t_spline_derivatives), b, r(theta))


if __name__ == "__main__":
    key = jax.random.PRNGKey(0)
    # N samples, K spline-basis dims (small, but exercises tiling + padding).
    N, K = 1500, 32

    keys = jax.random.split(key, 8)
    z = jax.random.normal(keys[0], (N, 1), jnp.float32)
    delta = (jax.random.uniform(keys[1], (N, 1)) > 0.5).astype(jnp.float32)
    Phi = jax.random.normal(keys[2], (N, 1), jnp.float32)
    # keep H_t_derivatives away from zero (it is a divisor)
    H_t_derivatives = jax.random.uniform(keys[3], (N, 1), jnp.float32,
                                         minval=0.5, maxval=1.5)
    t_splines = jax.random.normal(keys[4], (N, K), jnp.float32)
    t_spline_derivatives = jax.random.normal(keys[5], (N, K), jnp.float32)
    b = jax.random.normal(keys[6], (N, 1), jnp.float32)
    theta = jax.random.normal(keys[7], (K, 1), jnp.float32)

    args = (z, delta, Phi, H_t_derivatives, t_splines, t_spline_derivatives,
            b, theta)

    # Hoisted layout work happens once here; loss_fn is the per-step callable.
    loss_fn = make_se_loss_fn(*args[:-1])
    out = jax.block_until_ready(loss_fn(theta))

    ref_f32 = jax.block_until_ready(_reference(*args))
    ref_b16 = jax.block_until_ready(_reference_bf16(*args))

    # Tight check against the bf16-rounded reference (same inputs the MXU sees).
    assert jnp.allclose(out, ref_b16, rtol=1e-3, atol=1e-4), (out, ref_b16)
    # Loose sanity check against the full-f32 reference (bf16 slab trade-off).
    assert jnp.allclose(out, ref_f32, rtol=5e-2, atol=1e-3), (out, ref_f32)
    print("KERNEL_OK")
</pallas_src>

<mosaic_0001>
module attributes {stable_mosaic.version = 11 : i64} {
  func.func @_se_loss_kernel(%arg0: i32, %arg1: i32, %arg2: memref<2x64xbf16, #tpu.memory_space<vmem>>, %arg3: memref<64x1536xbf16, #tpu.memory_space<vmem>>, %arg4: memref<3x1536xf32, #tpu.memory_space<vmem>>, %arg5: memref<1x1x128xf32, #tpu.memory_space<vmem>>, %arg6: memref<1x1536xf32, #tpu.memory_space<vmem>>) attributes {dimension_semantics = [#tpu.dimension_semantics<parallel>, #tpu.dimension_semantics<arbitrary>], iteration_bounds = array<i64: 1, 1>, scalar_prefetch = 0 : i64, scratch_operands = 1 : i64, tpu.core_type = #tpu.core_type<tc>, window_params = [{pipeline_mode = #tpu.pipeline_mode<synchronous>, transform_indices = @transform_0, window_bounds = array<i64: 2, 64>}, {transform_indices = @transform_1, window_bounds = array<i64: 64, 1536>}, {transform_indices = @transform_2, window_bounds = array<i64: 3, 1536>}, {transform_indices = @transform_3, window_bounds = array<i64: 1, 1, 128>}]} {
    %c0_i32 = arith.constant 0 : i32
    %0 = arith.cmpi eq, %arg1, %c0_i32 : i32
    %1 = arith.extui %0 : i1 to i32
    %c0_i32_0 = arith.constant 0 : i32
    %2 = arith.cmpi ne, %1, %c0_i32_0 : i32
    scf.if %2 {
      %cst_12 = arith.constant 0.000000e+00 : f32
      %23 = vector.broadcast %cst_12 : f32 to vector<1x1536xf32>
      %c0_13 = arith.constant 0 : index
      %c0_14 = arith.constant 0 : index
      %24 = vector.load %arg6[%c0_13, %c0_14] : memref<1x1536xf32, #tpu.memory_space<vmem>>, vector<1x1536xf32>
      tpu.vector_store %arg6[%c0_13, %c0_14], %23 {strides = array<i32>} : memref<1x1536xf32, #tpu.memory_space<vmem>>, vector<1x1536xf32>,
    } else {
    }
    %c0 = arith.constant 0 : index
    %c0_1 = arith.constant 0 : index
    %3 = vector.load %arg2[%c0, %c0_1] : memref<2x64xbf16, #tpu.memory_space<vmem>>, vector<2x64xbf16>
    %c0_2 = arith.constant 0 : index
    %c0_3 = arith.constant 0 : index
    %4 = vector.load %arg3[%c0_2, %c0_3] : memref<64x1536xbf16, #tpu.memory_space<vmem>>, vector<64x1536xbf16>
    %cst = arith.constant dense<0.000000e+00> : vector<2x1536xf32>
    %5 = tpu.matmul %3, %4, %cst {dimension_numbers = #tpu.dot_dimension_numbers<[1], [0], [0], [1], [0, 0, 1, 1], [], []>} : vector<2x64xbf16>, vector<64x1536xbf16>, vector<2x1536xf32> -> vector<2x1536xf32>
    %6 = vector.extract_strided_slice %5 {offsets = [0, 0], sizes = [1, 1536], strides = [1, 1]} : vector<2x1536xf32> to vector<1x1536xf32>
    %7 = vector.extract_strided_slice %5 {offsets = [1, 0], sizes = [1, 1536], strides = [1, 1]} : vector<2x1536xf32> to vector<1x1536xf32>
    %c0_4 = arith.constant 0 : index
    %c0_5 = arith.constant 0 : index
    %8 = vector.load %arg4[%c0_4, %c0_5] : memref<3x1536xf32, #tpu.memory_space<vmem>>, vector<3x1536xf32>
    %9 = vector.extract_strided_slice %8 {offsets = [0, 0], sizes = [1, 1536], strides = [1, 1]} : vector<3x1536xf32> to vector<1x1536xf32>
    %10 = vector.extract_strided_slice %8 {offsets = [1, 0], sizes = [1, 1536], strides = [1, 1]} : vector<3x1536xf32> to vector<1x1536xf32>
    %11 = vector.extract_strided_slice %8 {offsets = [2, 0], sizes = [1, 1536], strides = [1, 1]} : vector<3x1536xf32> to vector<1x1536xf32>
    %12 = arith.subf %9, %6 : vector<1x1536xf32>
    %13 = arith.mulf %12, %10 : vector<1x1536xf32>
    %14 = arith.mulf %7, %11 : vector<1x1536xf32>
    %15 = arith.subf %13, %14 : vector<1x1536xf32>
    %c0_6 = arith.constant 0 : index
    %c0_7 = arith.constant 0 : index
    %16 = vector.load %arg6[%c0_6, %c0_7] : memref<1x1536xf32, #tpu.memory_space<vmem>>, vector<1x1536xf32>
    %17 = arith.mulf %15, %15 : vector<1x1536xf32>
    %18 = arith.addf %16, %17 : vector<1x1536xf32>
    %c0_8 = arith.constant 0 : index
    %c0_9 = arith.constant 0 : index
    %19 = vector.load %arg6[%c0_8, %c0_9] : memref<1x1536xf32, #tpu.memory_space<vmem>>, vector<1x1536xf32>
    tpu.vector_store %arg6[%c0_8, %c0_9], %18 {strides = array<i32>} : memref<1x1536xf32, #tpu.memory_space<vmem>>, vector<1x1536xf32>,
    %c0_i32_10 = arith.constant 0 : i32
    %20 = arith.cmpi eq, %arg1, %c0_i32_10 : i32
    %21 = arith.extui %20 : i1 to i32
    %c0_i32_11 = arith.constant 0 : i32
    %22 = arith.cmpi ne, %21, %c0_i32_11 : i32
    scf.if %22 {
      %c0_12 = arith.constant 0 : index
      %c0_13 = arith.constant 0 : index
      %23 = vector.load %arg6[%c0_12, %c0_13] : memref<1x1536xf32, #tpu.memory_space<vmem>>, vector<1x1536xf32>
      %24 = vector.shape_cast %23 : vector<1x1536xf32> to vector<1x1x1536xf32>
      %cst_14 = arith.constant dense<0.000000e+00> : vector<1xf32>
      %25 = vector.multi_reduction <add>, %24, %cst_14 [1, 2] : vector<1x1x1536xf32> to vector<1xf32>
      %26 = vector.shape_cast %25 : vector<1xf32> to vector<1x1x1xf32>
      %27 = vector.extract %26[0, 0, 0] : f32 from vector<1x1x1xf32>
      %cst_15 = arith.constant 6.66666659E-4 : f32
      %28 = arith.mulf %27, %cst_15 : f32
      %29 = vector.broadcast %28 : f32 to vector<1x1x128xf32>
      %c0_16 = arith.constant 0 : index
      %c0_17 = arith.constant 0 : index
      %c0_18 = arith.constant 0 : index
      %30 = vector.load %arg5[%c0_16, %c0_17, %c0_18] : memref<1x1x128xf32, #tpu.memory_space<vmem>>, vector<1x1x128xf32>
      tpu.vector_store %arg5[%c0_16, %c0_17, %c0_18], %29 {strides = array<i32>} : memref<1x1x128xf32, #tpu.memory_space<vmem>>, vector<1x1x128xf32>,
    } else {
    }
    return
  }
  func.func @transform_0(%arg0: i32, %arg1: i32) -> (i32, i32) {
    %c0_i32 = arith.constant 0 : i32
    %c0_i32_0 = arith.constant 0 : i32
    %c0_i32_1 = arith.constant 0 : i32
    return %c0_i32, %c0_i32_0 : i32, i32
  }
  func.func @transform_1(%arg0: i32, %arg1: i32) -> (i32, i32) {
    %c1_i32 = arith.constant 1 : i32
    %0 = arith.muli %arg0, %c1_i32 : i32
    %1 = arith.addi %0, %arg1 : i32
    %c0_i32 = arith.constant 0 : i32
    %c0_i32_0 = arith.constant 0 : i32
    return %c0_i32, %1 : i32, i32
  }
  func.func @transform_2(%arg0: i32, %arg1: i32) -> (i32, i32) {
    %c1_i32 = arith.constant 1 : i32
    %0 = arith.muli %arg0, %c1_i32 : i32
    %1 = arith.addi %0, %arg1 : i32
    %c0_i32 = arith.constant 0 : i32
    %c0_i32_0 = arith.constant 0 : i32
    return %c0_i32, %1 : i32, i32
  }
  func.func @transform_3(%arg0: i32, %arg1: i32) -> (i32, i32, i32) {
    %c0_i32 = arith.constant 0 : i32
    %c0_i32_0 = arith.constant 0 : i32
    %c0_i32_1 = arith.constant 0 : i32
    return %arg0, %c0_i32, %c0_i32_0 : i32, i32, i32
  }
}

</mosaic_0001>

<llo_original>
// kernel: loss.1
$region0: #{loss.1}
  #allocation0 [shape = 'u32[]', space=smem, size = 0x4, offset = 0x4, fixed_abs, tag = 'smem constant byte address 0x4 - core index']
  #allocation1 [shape = 'u32[144,128]{1,0:T(1,128)}', space=vmem, size = 0x12000, scoped, tag = 'internal scratch']
  #allocation2 [shape = 'f32[1,1536]{1,0:T(1,128)}', space=vmem, size = 0x1800, scoped, tag = 'scratch operand']
  %s0 = inlined_call_operand.vmem [shape: bf16[2,64], index: 0, kind: input, shape index: {}]
  %s1 = inlined_call_operand.hbm [shape: bf16[64,1536], index: 1, kind: input, shape index: {}]
  %s2 = inlined_call_operand.hbm [shape: f32[3,1536], index: 2, kind: input, shape index: {}]
  %s3 = inlined_call_operand.hbm [shape: f32[1,1,128], index: 3, kind: output, shape index: {}]
  %s4 = sld [smem:[#allocation0]]
  $region38: #{loss.1} parent=0
    _
  %s6 = ssub.s32 1, %s4
  %s7 = scalar_select 0, %s6, %s4
  $region1: #{loss.1} parent=0
    #allocation3 [shape = 'u8[196608]{0}', space=vmem, size = 0x30000, scoped, tag = 'input window, operand 1, single buffered']
    #allocation4 [shape = 's32[1]{0}', space=sflag, size = 0x4, scoped, tag = 'scoped memory for loss.1']
    #allocation5 [shape = 's32[1]{0}', space=sflag, size = 0x4, scoped, tag = 'scoped memory for loss.1']
    #allocation6 [shape = 'u8[24576]{0}', space=vmem, size = 0x6000, scoped, tag = 'input window, operand 2, single buffered']
    #allocation7 [shape = 's32[1]{0}', space=sflag, size = 0x4, scoped, tag = 'scoped memory for loss.1']
    #allocation8 [shape = 'u8[512]{0}', space=vmem, size = 0x400, scoped, tag = 'output window, operand 0, single buffered']
    %8 = vsyncpa [#allocation4], 0
    %9 = vsyncpa [#allocation7], 0
    %10 = vsyncpa [#allocation5], 0
    // Predicated region
    $region2: #{loss.1} parent=1 // pred_check
      _
    $region3: #{loss.1} parent=1 // pred_check_branch
      %12 = sbr.rel (0) target = $region5
    $region4: #{loss.1} parent=1 // pred_region
      _
    $region5: #{loss.1} parent=1 // pred_fallthru
      _
    // Predicated region
    $region6: #{loss.1} parent=1 // pred_check
      _
    $region7: #{loss.1} parent=1 // pred_check_branch
      %14 = sbr.rel (0) target = $region9
    $region8: #{loss.1} parent=1 // pred_region
      %s15 = sadd.s32 0, 0
      %s16 = smul.u32 12, %s15
      %s18 = ssub.s32 6144, 6144
      %19 = vsyncadd [#allocation4], %s18
      %s20 = smul.addr %s16, 64
      %s21 = scalar_lea.hbm %s1, %s20
      %s22 = sshll.u32 [#allocation3], 4
      %s23 = int_to_ptr.vmem [resolvable:$true] %s22
      %28 = dma.hbm_to_vmem [thread:$0]  %s21, 6144, %s23, [#allocation4], 768, 768, 48
    $region9: #{loss.1} parent=1 // pred_fallthru
      _
    // Predicated region
    $region10: #{loss.1} parent=1 // pred_check
      _
    $region11: #{loss.1} parent=1 // pred_check_branch
      %30 = sbr.rel (0) target = $region13
    $region12: #{loss.1} parent=1 // pred_region
      %s31 = sadd.s32 0, 0
      %s32 = smul.u32 12, %s31
      %s34 = ssub.s32 768, 768
      %35 = vsyncadd [#allocation7], %s34
      %s36 = smul.addr %s32, 64
      %s37 = scalar_lea.hbm %s2, %s36
      %s39 = sshll.u32 [#allocation6], 4
      %s40 = int_to_ptr.vmem [resolvable:$true] %s39
      %42 = dma.hbm_to_vmem [thread:$0]  %s37, 768, %s40, [#allocation7]
    $region13: #{loss.1} parent=1 // pred_fallthru
      _
    // Predicated region
    $region14: #{loss.1} parent=1 // pred_check
      _
    $region15: #{loss.1} parent=1 // pred_check_branch
      %44 = sbr.rel (0) target = $region17
    $region16: #{loss.1} parent=1 // pred_region
      %45 = dma.done [#allocation4], 6144
    $region17: #{loss.1} parent=1 // pred_fallthru
      _
    // Predicated region
    $region18: #{loss.1} parent=1 // pred_check
      _
    $region19: #{loss.1} parent=1 // pred_check_branch
      %47 = sbr.rel (0) target = $region21
    $region20: #{loss.1} parent=1 // pred_region
      %48 = dma.done [#allocation7], 768
    $region21: #{loss.1} parent=1 // pred_fallthru
      _
    %s49 = sadd.s32 0, 0
    %s50 = smul.u32 12, %s49
    %s51 = sadd.s32 0, 0
    %s52 = smul.u32 12, %s51
    %p54 = scmp.eq.s32.totalorder 0, 0
    // Predicated region
    $region22: #{loss.1} parent=1 // pred_check
      %p55 = pneg %p54
    $region23: #{loss.1} parent=1 // pred_check_branch
      %57 = sbr.rel (%p55) target = $region25
    $region24: #{loss.1} parent=1 // pred_region
      %58 = vst [vmem:[#allocation2] sm:$0xff] 0.0
      %v59 = vlaneseq
      %vm60 = vcmp.ge.s32.totalorder %v59, 0
      %vm61 = vcmp.lt.s32.totalorder %v59, 512
      %vm62 = vmand %vm60, %vm61
      %63 = vst.msk [vmem:[#allocation2 + $0x8] sm:$0xf] %vm62, 0.0
    $region25: #{loss.1} parent=1 // pred_fallthru
      _
    %v64 = vld [vmem:[%s0] sm:$0x1]
    %v65 = vld [vmem:[#allocation3] sm:$0xff]
    %v66 = vld [vmem:[#allocation3 + $0x8] sm:$0xff]
    %v67 = vld [vmem:[#allocation3 + $0x10] sm:$0xff]
    %v68 = vld [vmem:[#allocation3 + $0x18] sm:$0xff]
    %v69 = vld [vmem:[#allocation3 + $0x20] sm:$0xff]
    %v70 = vld [vmem:[#allocation3 + $0x28] sm:$0xff]
    %v71 = vld [vmem:[#allocation3 + $0x30] sm:$0xff]
    %v72 = vld [vmem:[#allocation3 + $0x38] sm:$0xff]
    %v73 = vld [vmem:[#allocation3 + $0x40] sm:$0xff]
    %v74 = vld [vmem:[#allocation3 + $0x48] sm:$0xff]
    %v75 = vld [vmem:[#allocation3 + $0x50] sm:$0xff]
    %v76 = vld [vmem:[#allocation3 + $0x58] sm:$0xff]
    %v77 = vld [vmem:[#allocation3 + $0x60] sm:$0xff]
    %v78 = vld [vmem:[#allocation3 + $0x68] sm:$0xff]
    %v79 = vld [vmem:[#allocation3 + $0x70] sm:$0xff]
    %v80 = vld [vmem:[#allocation3 + $0x78] sm:$0xff]
    %v81 = vld [vmem:[#allocation3 + $0x80] sm:$0xff]
    %v82 = vld [vmem:[#allocation3 + $0x88] sm:$0xff]
    %v83 = vld [vmem:[#allocation3 + $0x90] sm:$0xff]
    %v84 = vld [vmem:[#allocation3 + $0x98] sm:$0xff]
    %v85 = vld [vmem:[#allocation3 + $0xa0] sm:$0xff]
    %v86 = vld [vmem:[#allocation3 + $0xa8] sm:$0xff]
    %v87 = vld [vmem:[#allocation3 + $0xb0] sm:$0xff]
    %v88 = vld [vmem:[#allocation3 + $0xb8] sm:$0xff]
    %v89 = vld [vmem:[#allocation3 + $0xc0] sm:$0xff]
    %v90 = vld [vmem:[#allocation3 + $0xc8] sm:$0xff]
    %v91 = vld [vmem:[#allocation3 + $0xd0] sm:$0xff]
    %v92 = vld [vmem:[#allocation3 + $0xd8] sm:$0xff]
    %v93 = vld [vmem:[#allocation3 + $0xe0] sm:$0xff]
    %v94 = vld [vmem:[#allocation3 + $0xe8] sm:$0xff]
    %v95 = vld [vmem:[#allocation3 + $0xf0] sm:$0xff]
    %v96 = vld [vmem:[#allocation3 + $0xf8] sm:$0xff]
    %v97 = vld [vmem:[#allocation3 + $0x100] sm:$0xff]
    %v98 = vld [vmem:[#allocation3 + $0x108] sm:$0xff]
    %v99 = vld [vmem:[#allocation3 + $0x110] sm:$0xff]
    %v100 = vld [vmem:[#allocation3 + $0x118] sm:$0xff]
    %v101 = vld [vmem:[#allocation3 + $0x120] sm:$0xff]
    %v102 = vld [vmem:[#allocation3 + $0x128] sm:$0xff]
    %v103 = vld [vmem:[#allocation3 + $0x130] sm:$0xff]
    %v104 = vld [vmem:[#allocation3 + $0x138] sm:$0xff]
    %v105 = vld [vmem:[#allocation3 + $0x140] sm:$0xff]
    %v106 = vld [vmem:[#allocation3 + $0x148] sm:$0xff]
    %v107 = vld [vmem:[#allocation3 + $0x150] sm:$0xff]
    %v108 = vld [vmem:[#allocation3 + $0x158] sm:$0xff]
    %v109 = vld [vmem:[#allocation3 + $0x160] sm:$0xff]
    %v110 = vld [vmem:[#allocation3 + $0x168] sm:$0xff]
    %v111 = vld [vmem:[#allocation3 + $0x170] sm:$0xff]
    %v112 = vld [vmem:[#allocation3 + $0x178] sm:$0xff]
    %v161 = vunpack.c.l.b16 %v65
    %v162 = vunpack.c.h.b16 %v65
    %v163 = vunpack.c.l.b16 %v66
    %v164 = vunpack.c.h.b16 %v66
    %v165 = vunpack.c.l.b16 %v67
    %v166 = vunpack.c.h.b16 %v67
    %v167 = vunpack.c.l.b16 %v68
    %v168 = vunpack.c.h.b16 %v68
    %v169 = vunpack.c.l.b16 %v69
    %v170 = vunpack.c.h.b16 %v69
    %v171 = vunpack.c.l.b16 %v70
    %v172 = vunpack.c.h.b16 %v70
    %v173 = vunpack.c.l.b16 %v71
    %v174 = vunpack.c.h.b16 %v71
    %v175 = vunpack.c.l.b16 %v72
    %v176 = vunpack.c.h.b16 %v72
    %v177 = vunpack.c.l.b16 %v73
    %v178 = vunpack.c.h.b16 %v73
    %v179 = vunpack.c.l.b16 %v74
    %v180 = vunpack.c.h.b16 %v74
    %v181 = vunpack.c.l.b16 %v75
    %v182 = vunpack.c.h.b16 %v75
    %v183 = vunpack.c.l.b16 %v76
    %v184 = vunpack.c.h.b16 %v76
    %v185 = vunpack.c.l.b16 %v77
    %v186 = vunpack.c.h.b16 %v77
    %v187 = vunpack.c.l.b16 %v78
    %v188 = vunpack.c.h.b16 %v78
    %v189 = vunpack.c.l.b16 %v79
    %v190 = vunpack.c.h.b16 %v79
    %v191 = vunpack.c.l.b16 %v80
    %v192 = vunpack.c.h.b16 %v80
    %v193 = vunpack.c.l.b16 %v81
    %v194 = vunpack.c.h.b16 %v81
    %v195 = vunpack.c.l.b16 %v82
    %v196 = vunpack.c.h.b16 %v82
    %v197 = vunpack.c.l.b16 %v83
    %v198 = vunpack.c.h.b16 %v83
    %v199 = vunpack.c.l.b16 %v84
    %v200 = vunpack.c.h.b16 %v84
    %v201 = vunpack.c.l.b16 %v85
    %v202 = vunpack.c.h.b16 %v85
    %v203 = vunpack.c.l.b16 %v86
    %v204 = vunpack.c.h.b16 %v86
    %v205 = vunpack.c.l.b16 %v87
    %v206 = vunpack.c.h.b16 %v87
    %v207 = vunpack.c.l.b16 %v88
    %v208 = vunpack.c.h.b16 %v88
    %v209 = vunpack.c.l.b16 %v89
    %v210 = vunpack.c.h.b16 %v89
    %v211 = vunpack.c.l.b16 %v90
    %v212 = vunpack.c.h.b16 %v90
    %v213 = vunpack.c.l.b16 %v91
    %v214 = vunpack.c.h.b16 %v91
    %v215 = vunpack.c.l.b16 %v92
    %v216 = vunpack.c.h.b16 %v92
    %v217 = vunpack.c.l.b16 %v93
    %v218 = vunpack.c.h.b16 %v93
    %v219 = vunpack.c.l.b16 %v94
    %v220 = vunpack.c.h.b16 %v94
    %v221 = vunpack.c.l.b16 %v95
    %v222 = vunpack.c.h.b16 %v95
    %v223 = vunpack.c.l.b16 %v96
    %v224 = vunpack.c.h.b16 %v96
    %v225 = vunpack.c.l.b16 %v97
    %v226 = vunpack.c.h.b16 %v97
    %v227 = vunpack.c.l.b16 %v98
    %v228 = vunpack.c.h.b16 %v98
    %v229 = vunpack.c.l.b16 %v99
    %v230 = vunpack.c.h.b16 %v99
    %v231 = vunpack.c.l.b16 %v100
    %v232 = vunpack.c.h.b16 %v100
    %v233 = vunpack.c.l.b16 %v101
    %v234 = vunpack.c.h.b16 %v101
    %v235 = vunpack.c.l.b16 %v102
    %v236 = vunpack.c.h.b16 %v102
    %v237 = vunpack.c.l.b16 %v103
    %v238 = vunpack.c.h.b16 %v103
    %v239 = vunpack.c.l.b16 %v104
    %v240 = vunpack.c.h.b16 %v104
    %v241 = vunpack.c.l.b16 %v105
    %v242 = vunpack.c.h.b16 %v105
    %v243 = vunpack.c.l.b16 %v106
    %v244 = vunpack.c.h.b16 %v106
    %v245 = vunpack.c.l.b16 %v107
    %v246 = vunpack.c.h.b16 %v107
    %v247 = vunpack.c.l.b16 %v108
    %v248 = vunpack.c.h.b16 %v108
    %v249 = vunpack.c.l.b16 %v109
    %v250 = vunpack.c.h.b16 %v109
    %v251 = vunpack.c.l.b16 %v110
    %v252 = vunpack.c.h.b16 %v110
    %v253 = vunpack.c.l.b16 %v111
    %v254 = vunpack.c.h.b16 %v111
    %v255 = vunpack.c.l.b16 %v112
    %v256 = vunpack.c.h.b16 %v112
    %v257 = vpack.c.b16 %v173, %v161
    %v258 = vpack.c.b16 %v174, %v162
    %v259 = vpack.c.b16 %v175, %v163
    %v260 = vpack.c.b16 %v176, %v164
    %v261 = vpack.c.b16 %v177, %v165
    %v262 = vpack.c.b16 %v178, %v166
    %v263 = vpack.c.b16 %v179, %v167
    %v264 = vpack.c.b16 %v180, %v168
    %v265 = vpack.c.b16 %v181, %v169
    %v266 = vpack.c.b16 %v182, %v170
    %v267 = vpack.c.b16 %v183, %v171
    %v268 = vpack.c.b16 %v184, %v172
    %v269 = vpack.c.b16 %v197, %v185
    %v270 = vpack.c.b16 %v198, %v186
    %v271 = vpack.c.b16 %v199, %v187
    %v272 = vpack.c.b16 %v200, %v188
    %v273 = vpack.c.b16 %v201, %v189
    %v274 = vpack.c.b16 %v202, %v190
    %v275 = vpack.c.b16 %v203, %v191
    %v276 = vpack.c.b16 %v204, %v192
    %v277 = vpack.c.b16 %v205, %v193
    %v278 = vpack.c.b16 %v206, %v194
    %v279 = vpack.c.b16 %v207, %v195
    %v280 = vpack.c.b16 %v208, %v196
    %v281 = vpack.c.b16 %v221, %v209
    %v282 = vpack.c.b16 %v222, %v210
    %v283 = vpack.c.b16 %v223, %v211
    %v284 = vpack.c.b16 %v224, %v212
    %v285 = vpack.c.b16 %v225, %v213
    %v286 = vpack.c.b16 %v226, %v214
    %v287 = vpack.c.b16 %v227, %v215
    %v288 = vpack.c.b16 %v228, %v216
    %v289 = vpack.c.b16 %v229, %v217
    %v290 = vpack.c.b16 %v230, %v218
    %v291 = vpack.c.b16 %v231, %v219
    %v292 = vpack.c.b16 %v232, %v220
    %v293 = vpack.c.b16 %v245, %v233
    %v294 = vpack.c.b16 %v246, %v234
    %v295 = vpack.c.b16 %v247, %v235
    %v296 = vpack.c.b16 %v248, %v236
    %v297 = vpack.c.b16 %v249, %v237
    %v298 = vpack.c.b16 %v250, %v238
    %v299 = vpack.c.b16 %v251, %v239
    %v300 = vpack.c.b16 %v252, %v240
    %v301 = vpack.c.b16 %v253, %v241
    %v302 = vpack.c.b16 %v254, %v242
    %v303 = vpack.c.b16 %v255, %v243
    %v304 = vpack.c.b16 %v256, %v244
    %vm353 = vcmask 523264
    %v355 = vsel %vm353, %v64, 0
    %357 = vmatprep.subr.bf16.mxu0 0
    %358 = vmatpush1.bf16.msra.mxu0 0
    %359 = vmatprep.subr.bf16.mxu0 0
    %360 = vmatpush1.bf16.msra.mxu0 0
    %361 = vmatprep.subr.bf16.mxu0 0
    %362 = vmatpush1.bf16.msra.mxu0 0
    %363 = vmatprep.subr.bf16.mxu0 0
    %364 = vmatpush1.bf16.msra.mxu0 0
    %365 = vmatprep.subr.bf16.mxu0 %v294
    %366 = vmatpush1.bf16.msra.mxu0 %v293
    %367 = vmatprep.subr.bf16.mxu0 %v282
    %368 = vmatpush1.bf16.msra.mxu0 %v281
    %369 = vmatprep.subr.bf16.mxu0 %v270
    %370 = vmatpush1.bf16.msra.mxu0 %v269
    %371 = vmatprep.subr.bf16.mxu0 %v258
    %372 = vmatpush1.bf16.msra.mxu0 %v257
    %373 = vmatprep.subr.bf16.mxu0 0
    %374 = vmatpush2.bf16.msra.mxu0 0
    %375 = vmatprep.subr.bf16.mxu0 0
    %376 = vmatpush2.bf16.msra.mxu0 0
    %377 = vmatprep.subr.bf16.mxu0 0
    %378 = vmatpush2.bf16.msra.mxu0 0
    %379 = vmatprep.subr.bf16.mxu0 0
    %380 = vmatpush2.bf16.msra.mxu0 0
    %381 = vmatprep.subr.bf16.mxu0 0
    %382 = vmatpush2.bf16.msra.mxu0 0
    %383 = vmatprep.subr.bf16.mxu0 0
    %384 = vmatpush2.bf16.msra.mxu0 0
    %385 = vmatprep.subr.bf16.mxu0 0
    %386 = vmatpush2.bf16.msra.mxu0 0
    %387 = vmatprep.subr.bf16.mxu0 0
    %388 = vmatpush2.bf16.msra.mxu0 0
    %389 = vmatprep.mubr.bf16.mxu0 0
    %390 = vmatmul.mubr.bf16.gmra.mxu0 %v355
    %v391 = vpop.f32.mrf.mxu0
    %v392 = vadd.f32 0.0, %v391
    %v393 = vpop.f32.mrf.mxu0
    %v394 = vadd.f32 0.0, %v393
    %v395 = vpop.f32.mrf.mxu0
    %v396 = vpop.f32.mrf.mxu0
    %397 = vdwg.mxu0
    %398 = vmatprep.subr.bf16.mxu0 0
    %399 = vmatpush1.bf16.msra.mxu0 0
    %400 = vmatprep.subr.bf16.mxu0 0
    %401 = vmatpush1.bf16.msra.mxu0 0
    %402 = vmatprep.subr.bf16.mxu0 0
    %403 = vmatpush1.bf16.msra.mxu0 0
    %404 = vmatprep.subr.bf16.mxu0 0
    %405 = vmatpush1.bf16.msra.mxu0 0
    %406 = vmatprep.subr.bf16.mxu0 %v296
    %407 = vmatpush1.bf16.msra.mxu0 %v295
    %408 = vmatprep.subr.bf16.mxu0 %v284
    %409 = vmatpush1.bf16.msra.mxu0 %v283
    %410 = vmatprep.subr.bf16.mxu0 %v272
    %411 = vmatpush1.bf16.msra.mxu0 %v271
    %412 = vmatprep.subr.bf16.mxu0 %v260
    %413 = vmatpush1.bf16.msra.mxu0 %v259
    %414 = vmatprep.subr.bf16.mxu0 0
    %415 = vmatpush2.bf16.msra.mxu0 0
    %416 = vmatprep.subr.bf16.mxu0 0
    %417 = vmatpush2.bf16.msra.mxu0 0
    %418 = vmatprep.subr.bf16.mxu0 0
    %419 = vmatpush2.bf16.msra.mxu0 0
    %420 = vmatprep.subr.bf16.mxu0 0
    %421 = vmatpush2.bf16.msra.mxu0 0
    %422 = vmatprep.subr.bf16.mxu0 0
    %423 = vmatpush2.bf16.msra.mxu0 0
    %424 = vmatprep.subr.bf16.mxu0 0
    %425 = vmatpush2.bf16.msra.mxu0 0
    %426 = vmatprep.subr.bf16.mxu0 0
    %427 = vmatpush2.bf16.msra.mxu0 0
    %428 = vmatprep.subr.bf16.mxu0 0
    %429 = vmatpush2.bf16.msra.mxu0 0
    %430 = vmatprep.mubr.bf16.mxu0 0
    %431 = vmatmul.mubr.bf16.gmra.mxu0 %v355
    %v432 = vpop.f32.mrf.mxu0
    %v433 = vadd.f32 0.0, %v432
    %v434 = vpop.f32.mrf.mxu0
    %v435 = vadd.f32 0.0, %v434
    %v436 = vpop.f32.mrf.mxu0
    %v437 = vpop.f32.mrf.mxu0
    %438 = vdwg.mxu0
    %439 = vmatprep.subr.bf16.mxu0 0
    %440 = vmatpush1.bf16.msra.mxu0 0
    %441 = vmatprep.subr.bf16.mxu0 0
    %442 = vmatpush1.bf16.msra.mxu0 0
    %443 = vmatprep.subr.bf16.mxu0 0
    %444 = vmatpush1.bf16.msra.mxu0 0
    %445 = vmatprep.subr.bf16.mxu0 0
    %446 = vmatpush1.bf16.msra.mxu0 0
    %447 = vmatprep.subr.bf16.mxu0 %v298
    %448 = vmatpush1.bf16.msra.mxu0 %v297
    %449 = vmatprep.subr.bf16.mxu0 %v286
    %450 = vmatpush1.bf16.msra.mxu0 %v285
    %451 = vmatprep.subr.bf16.mxu0 %v274
    %452 = vmatpush1.bf16.msra.mxu0 %v273
    %453 = vmatprep.subr.bf16.mxu0 %v262
    %454 = vmatpush1.bf16.msra.mxu0 %v261
    %455 = vmatprep.subr.bf16.mxu0 0
    %456 = vmatpush2.bf16.msra.mxu0 0
    %457 = vmatprep.subr.bf16.mxu0 0
    %458 = vmatpush2.bf16.msra.mxu0 0
    %459 = vmatprep.subr.bf16.mxu0 0
    %460 = vmatpush2.bf16.msra.mxu0 0
    %461 = vmatprep.subr.bf16.mxu0 0
    %462 = vmatpush2.bf16.msra.mxu0 0
    %463 = vmatprep.subr.bf16.mxu0 0
    %464 = vmatpush2.bf16.msra.mxu0 0
    %465 = vmatprep.subr.bf16.mxu0 0
    %466 = vmatpush2.bf16.msra.mxu0 0
    %467 = vmatprep.subr.bf16.mxu0 0
    %468 = vmatpush2.bf16.msra.mxu0 0
    %469 = vmatprep.subr.bf16.mxu0 0
    %470 = vmatpush2.bf16.msra.mxu0 0
    %471 = vmatprep.mubr.bf16.mxu0 0
    %472 = vmatmul.mubr.bf16.gmra.mxu0 %v355
    %v473 = vpop.f32.mrf.mxu0
    %v474 = vadd.f32 0.0, %v473
    %v475 = vpop.f32.mrf.mxu0
    %v476 = vadd.f32 0.0, %v475
    %v477 = vpop.f32.mrf.mxu0
    %v478 = vpop.f32.mrf.mxu0
    %479 = vdwg.mxu0
    %480 = vmatprep.subr.bf16.mxu0 0
    %481 = vmatpush1.bf16.msra.mxu0 0
    %482 = vmatprep.subr.bf16.mxu0 0
    %483 = vmatpush1.bf16.msra.mxu0 0
    %484 = vmatprep.subr.bf16.mxu0 0
    %485 = vmatpush1.bf16.msra.mxu0 0
    %486 = vmatprep.subr.bf16.mxu0 0
    %487 = vmatpush1.bf16.msra.mxu0 0
    %488 = vmatprep.subr.bf16.mxu0 %v300
    %489 = vmatpush1.bf16.msra.mxu0 %v299
    %490 = vmatprep.subr.bf16.mxu0 %v288
    %491 = vmatpush1.bf16.msra.mxu0 %v287
    %492 = vmatprep.subr.bf16.mxu0 %v276
    %493 = vmatpush1.bf16.msra.mxu0 %v275
    %494 = vmatprep.subr.bf16.mxu0 %v264
    %495 = vmatpush1.bf16.msra.mxu0 %v263
    %496 = vmatprep.subr.bf16.mxu0 0
    %497 = vmatpush2.bf16.msra.mxu0 0
    %498 = vmatprep.subr.bf16.mxu0 0
    %499 = vmatpush2.bf16.msra.mxu0 0
    %500 = vmatprep.subr.bf16.mxu0 0
    %501 = vmatpush2.bf16.msra.mxu0 0
    %502 = vmatprep.subr.bf16.mxu0 0
    %503 = vmatpush2.bf16.msra.mxu0 0
    %504 = vmatprep.subr.bf16.mxu0 0
    %505 = vmatpush2.bf16.msra.mxu0 0
    %506 = vmatprep.subr.bf16.mxu0 0
    %507 = vmatpush2.bf16.msra.mxu0 0
    %508 = vmatprep.subr.bf16.mxu0 0
    %509 = vmatpush2.bf16.msra.mxu0 0
    %510 = vmatprep.subr.bf16.mxu0 0
    %511 = vmatpush2.bf16.msra.mxu0 0
    %512 = vmatprep.mubr.bf16.mxu0 0
    %513 = vmatmul.mubr.bf16.gmra.mxu0 %v355
    %v514 = vpop.f32.mrf.mxu0
    %v515 = vadd.f32 0.0, %v514
    %v516 = vpop.f32.mrf.mxu0
    %v517 = vadd.f32 0.0, %v516
    %v518 = vpop.f32.mrf.mxu0
    %v519 = vpop.f32.mrf.mxu0
    %520 = vdwg.mxu0
    %521 = vmatprep.subr.bf16.mxu0 0
    %522 = vmatpush1.bf16.msra.mxu0 0
    %523 = vmatprep.subr.bf16.mxu0 0
    %524 = vmatpush1.bf16.msra.mxu0 0
    %525 = vmatprep.subr.bf16.mxu0 0
    %526 = vmatpush1.bf16.msra.mxu0 0
    %527 = vmatprep.subr.bf16.mxu0 0
    %528 = vmatpush1.bf16.msra.mxu0 0
    %529 = vmatprep.subr.bf16.mxu0 %v302
    %530 = vmatpush1.bf16.msra.mxu0 %v301
    %531 = vmatprep.subr.bf16.mxu0 %v290
    %532 = vmatpush1.bf16.msra.mxu0 %v289
    %533 = vmatprep.subr.bf16.mxu0 %v278
    %534 = vmatpush1.bf16.msra.mxu0 %v277
    %535 = vmatprep.subr.bf16.mxu0 %v266
    %536 = vmatpush1.bf16.msra.mxu0 %v265
    %537 = vmatprep.subr.bf16.mxu0 0
    %538 = vmatpush2.bf16.msra.mxu0 0
    %539 = vmatprep.subr.bf16.mxu0 0
    %540 = vmatpush2.bf16.msra.mxu0 0
    %541 = vmatprep.subr.bf16.mxu0 0
    %542 = vmatpush2.bf16.msra.mxu0 0
    %543 = vmatprep.subr.bf16.mxu0 0
    %544 = vmatpush2.bf16.msra.mxu0 0
    %545 = vmatprep.subr.bf16.mxu0 0
    %546 = vmatpush2.bf16.msra.mxu0 0
    %547 = vmatprep.subr.bf16.mxu0 0
    %548 = vmatpush2.bf16.msra.mxu0 0
    %549 = vmatprep.subr.bf16.mxu0 0
    %550 = vmatpush2.bf16.msra.mxu0 0
    %551 = vmatprep.subr.bf16.mxu0 0
    %552 = vmatpush2.bf16.msra.mxu0 0
    %553 = vmatprep.mubr.bf16.mxu0 0
    %554 = vmatmul.mubr.bf16.gmra.mxu0 %v355
    %v555 = vpop.f32.mrf.mxu0
    %v556 = vadd.f32 0.0, %v555
    %v557 = vpop.f32.mrf.mxu0
    %v558 = vadd.f32 0.0, %v557
    %v559 = vpop.f32.mrf.mxu0
    %v560 = vpop.f32.mrf.mxu0
    %561 = vdwg.mxu0
    %562 = vmatprep.subr.bf16.mxu0 0
    %563 = vmatpush1.bf16.msra.mxu0 0
    %564 = vmatprep.subr.bf16.mxu0 0
    %565 = vmatpush1.bf16.msra.mxu0 0
    %566 = vmatprep.subr.bf16.mxu0 0
    %567 = vmatpush1.bf16.msra.mxu0 0
    %568 = vmatprep.subr.bf16.mxu0 0
    %569 = vmatpush1.bf16.msra.mxu0 0
    %570 = vmatprep.subr.bf16.mxu0 %v304
    %571 = vmatpush1.bf16.msra.mxu0 %v303
    %572 = vmatprep.subr.bf16.mxu0 %v292
    %573 = vmatpush1.bf16.msra.mxu0 %v291
    %574 = vmatprep.subr.bf16.mxu0 %v280
    %575 = vmatpush1.bf16.msra.mxu0 %v279
    %576 = vmatprep.subr.bf16.mxu0 %v268
    %577 = vmatpush1.bf16.msra.mxu0 %v267
    %578 = vmatprep.subr.bf16.mxu0 0
    %579 = vmatpush2.bf16.msra.mxu0 0
    %580 = vmatprep.subr.bf16.mxu0 0
    %581 = vmatpush2.bf16.msra.mxu0 0
    %582 = vmatprep.subr.bf16.mxu0 0
    %583 = vmatpush2.bf16.msra.mxu0 0
    %584 = vmatprep.subr.bf16.mxu0 0
    %585 = vmatpush2.bf16.msra.mxu0 0
    %586 = vmatprep.subr.bf16.mxu0 0
    %587 = vmatpush2.bf16.msra.mxu0 0
    %588 = vmatprep.subr.bf16.mxu0 0
    %589 = vmatpush2.bf16.msra.mxu0 0
    %590 = vmatprep.subr.bf16.mxu0 0
    %591 = vmatpush2.bf16.msra.mxu0 0
    %592 = vmatprep.subr.bf16.mxu0 0
    %593 = vmatpush2.bf16.msra.mxu0 0
    %594 = vmatprep.mubr.bf16.mxu0 0
    %595 = vmatmul.mubr.bf16.gmra.mxu0 %v355
    %v596 = vpop.f32.mrf.mxu0
    %v597 = vadd.f32 0.0, %v596
    %v598 = vpop.f32.mrf.mxu0
    %v599 = vadd.f32 0.0, %v598
    %v600 = vpop.f32.mrf.mxu0
    %v601 = vpop.f32.mrf.mxu0
    %602 = vdwg.mxu0
    %v603 = vld [vmem:[#allocation6] sm:$0x77]
    %v604 = vld [vmem:[#allocation6 + $0x8] sm:$0x77]
    %v605 = vld [vmem:[#allocation6 + $0x10] sm:$0x77]
    %v606 = vld [vmem:[#allocation6 + $0x18] sm:$0x77]
    %v607 = vld [vmem:[#allocation6 + $0x20] sm:$0x77]
    %v608 = vld [vmem:[#allocation6 + $0x28] sm:$0x77]
    %v621 = vcombine.low %v392, %v394
    %v622 = vcombine.low %v433, %v435
    %v623 = vcombine.low %v474, %v476
    %v624 = vcombine.low %v515, %v517
    %v625 = vcombine.low %v556, %v558
    %v626 = vcombine.low %v597, %v599
    %v633 = vsub.f32 %v603, %v621
    %v634 = vsub.f32 %v604, %v622
    %v635 = vsub.f32 %v605, %v623
    %v636 = vsub.f32 %v606, %v624
    %v637 = vsub.f32 %v607, %v625
    %v638 = vsub.f32 %v608, %v626
    %v645 = vrot.slane %v603, 5
    %v646 = vrot.slane %v645, 4
    %v647 = vrot.slane %v604, 5
    %v648 = vrot.slane %v647, 4
    %v649 = vrot.slane %v605, 5
    %v650 = vrot.slane %v649, 4
    %v651 = vrot.slane %v606, 5
    %v652 = vrot.slane %v651, 4
    %v653 = vrot.slane %v607, 5
    %v654 = vrot.slane %v653, 4
    %v655 = vrot.slane %v608, 5
    %v656 = vrot.slane %v655, 4
    %v663 = vmul.f32 %v633, %v646
    %v664 = vmul.f32 %v634, %v648
    %v665 = vmul.f32 %v635, %v650
    %v666 = vmul.f32 %v636, %v652
    %v667 = vmul.f32 %v637, %v654
    %v668 = vmul.f32 %v638, %v656
    %v669 = vlaneseq
    %v670 = vshrl.u32 %v669, 7
    %v671 = vsub.s32 2, %v670
    %v672 = vrot.slane %v603, %v671
    %v673 = vlaneseq
    %v674 = vshrl.u32 %v673, 7
    %v675 = vsub.s32 6, %v674
    %v676 = vrot.slane %v603, %v675
    %v677 = vlaneseq
    %v678 = vshrl.u32 %v677, 7
    %v679 = vsub.s32 2, %v678
    %v680 = vrot.slane %v604, %v679
    %v681 = vlaneseq
    %v682 = vshrl.u32 %v681, 7
    %v683 = vsub.s32 6, %v682
    %v684 = vrot.slane %v604, %v683
    %v685 = vlaneseq
    %v686 = vshrl.u32 %v685, 7
    %v687 = vsub.s32 2, %v686
    %v688 = vrot.slane %v605, %v687
    %v689 = vlaneseq
    %v690 = vshrl.u32 %v689, 7
    %v691 = vsub.s32 6, %v690
    %v692 = vrot.slane %v605, %v691
    %v693 = vlaneseq
    %v694 = vshrl.u32 %v693, 7
    %v695 = vsub.s32 2, %v694
    %v696 = vrot.slane %v606, %v695
    %v697 = vlaneseq
    %v698 = vshrl.u32 %v697, 7
    %v699 = vsub.s32 6, %v698
    %v700 = vrot.slane %v606, %v699
    %v701 = vlaneseq
    %v702 = vshrl.u32 %v701, 7
    %v703 = vsub.s32 2, %v702
    %v704 = vrot.slane %v607, %v703
    %v705 = vlaneseq
    %v706 = vshrl.u32 %v705, 7
    %v707 = vsub.s32 6, %v706
    %v708 = vrot.slane %v607, %v707
    %v709 = vlaneseq
    %v710 = vshrl.u32 %v709, 7
    %v711 = vsub.s32 2, %v710
    %v712 = vrot.slane %v608, %v711
    %v713 = vlaneseq
    %v714 = vshrl.u32 %v713, 7
    %v715 = vsub.s32 6, %v714
    %v716 = vrot.slane %v608, %v715
    %v729 = vmul.f32 %v392, %v672
    %v730 = vmul.f32 %v394, %v676
    %v731 = vmul.f32 %v433, %v680
    %v732 = vmul.f32 %v435, %v684
    %v733 = vmul.f32 %v474, %v688
    %v734 = vmul.f32 %v476, %v692
    %v735 = vmul.f32 %v515, %v696
    %v736 = vmul.f32 %v517, %v700
    %v737 = vmul.f32 %v556, %v704
    %v738 = vmul.f32 %v558, %v708
    %v739 = vmul.f32 %v597, %v712
    %v740 = vmul.f32 %v599, %v716
    %v753 = vcombine.low %v729, %v730
    %v754 = vcombine.low %v731, %v732
    %v755 = vcombine.low %v733, %v734
    %v756 = vcombine.low %v735, %v736
    %v757 = vcombine.low %v737, %v738
    %v758 = vcombine.low %v739, %v740
    %v759 = vrot.slane %v753, 5
    %v760 = vrot.slane %v759, 4
    %v761 = vrot.slane %v754, 5
    %v762 = vrot.slane %v761, 4
    %v763 = vrot.slane %v755, 5
    %v764 = vrot.slane %v763, 4
    %v765 = vrot.slane %v756, 5
    %v766 = vrot.slane %v765, 4
    %v767 = vrot.slane %v757, 5
    %v768 = vrot.slane %v767, 4
    %v769 = vrot.slane %v758, 5
    %v770 = vrot.slane %v769, 4
    %v777 = vsub.f32 %v663, %v760
    %v778 = vsub.f32 %v664, %v762
    %v779 = vsub.f32 %v665, %v764
    %v780 = vsub.f32 %v666, %v766
    %v781 = vsub.f32 %v667, %v768
    %v782 = vsub.f32 %v668, %v770
    %v783 = vld [vmem:[#allocation2] sm:$0xff]
    %v784 = vld [vmem:[#allocation2 + $0x8] sm:$0xf]
    %v785 = vmul.f32 %v777, %v777
    %v786 = vmul.f32 %v778, %v778
    %v787 = vmul.f32 %v779, %v779
    %v788 = vmul.f32 %v780, %v780
    %v789 = vmul.f32 %v781, %v781
    %v790 = vmul.f32 %v782, %v782
    %v798 = vunpack.c.l.s4 1966171168
    %v799 = vunpack.c.0.s8 %v798
    %v800 = vlaneseq
    %v801 = vshrl.u32 %v800, 7
    %v802 = vsub.s32 %v799, %v801
    %v803 = vrot.slane %v785, %v802
    %v805 = vunpack.c.l.s4 1966171168
    %v806 = vunpack.c.0.s8 %v805
    %v807 = vlaneseq
    %v808 = vshrl.u32 %v807, 7
    %v809 = vsub.s32 %v806, %v808
    %v810 = vrot.slane %v786, %v809
    %v812 = vunpack.c.l.s4 1966171168
    %v813 = vunpack.c.0.s8 %v812
    %v814 = vlaneseq
    %v815 = vshrl.u32 %v814, 7
    %v816 = vsub.s32 %v813, %v815
    %v817 = vrot.slane %v787, %v816
    %v819 = vunpack.c.l.s4 1966171168
    %v820 = vunpack.c.0.s8 %v819
    %v821 = vlaneseq
    %v822 = vshrl.u32 %v821, 7
    %v823 = vsub.s32 %v820, %v822
    %v824 = vrot.slane %v788, %v823
    %v825 = vcombine.low %v803, %v810
    %v826 = vcombine.low %v817, %v824
    %v828 = vunpack.c.l.s4 1966171168
    %v829 = vunpack.c.0.s8 %v828
    %v830 = vlaneseq
    %v831 = vshrl.u32 %v830, 7
    %v832 = vsub.s32 %v829, %v831
    %v833 = vrot.slane %v825, %v832
    %v835 = vunpack.c.l.s4 1966171168
    %v836 = vunpack.c.0.s8 %v835
    %v837 = vlaneseq
    %v838 = vshrl.u32 %v837, 7
    %v839 = vsub.s32 %v836, %v838
    %v840 = vrot.slane %v826, %v839
    %v841 = vcombine.low %v833, %v840
    %v843 = vunpack.c.l.s4 1966171168
    %v844 = vunpack.c.0.s8 %v843
    %v845 = vlaneseq
    %v846 = vshrl.u32 %v845, 7
    %v847 = vsub.s32 %v844, %v846
    %v848 = vrot.slane %v789, %v847
    %v850 = vunpack.c.l.s4 1966171168
    %v851 = vunpack.c.0.s8 %v850
    %v852 = vlaneseq
    %v853 = vshrl.u32 %v852, 7
    %v854 = vsub.s32 %v851, %v853
    %v855 = vrot.slane %v790, %v854
    %v856 = vcombine.low %v848, %v855
    %v858 = vunpack.c.l.s4 1966171168
    %v859 = vunpack.c.0.s8 %v858
    %v860 = vlaneseq
    %v861 = vshrl.u32 %v860, 7
    %v862 = vsub.s32 %v859, %v861
    %v863 = vrot.slane %v856, %v862
    %v866 = vadd.f32 %v783, %v841
    %v867 = vadd.f32 %v784, %v863
    %868 = vst [vmem:[#allocation2] sm:$0xff] %v866
    %v869 = vlaneseq
    %vm870 = vcmp.ge.s32.totalorder %v869, 0
    %vm871 = vcmp.lt.s32.totalorder %v869, 512
    %vm872 = vmand %vm870, %vm871
    %873 = vst.msk [vmem:[#allocation2 + $0x8] sm:$0xf] %vm872, %v867
    // Predicated region
    $region26: #{loss.1} parent=1 // pred_check
      %p874 = pneg %p54
    $region27: #{loss.1} parent=1 // pred_check_branch
      %876 = sbr.rel (%p874) target = $region29
    $region28: #{loss.1} parent=1 // pred_region
      %v877 = vld [vmem:[#allocation2] sm:$0xff]
      %v878 = vld [vmem:[#allocation2 + $0x8] sm:$0xf]
      %v881 = vlaneseq
      %v882 = vshrl.u32 %v881, 7
      %v883 = vsub.s32 0, %v882
      %v884 = vrot.slane %v877, %v883
      %v885 = vlaneseq
      %v886 = vshrl.u32 %v885, 7
      %v887 = vsub.s32 1, %v886
      %v888 = vrot.slane %v877, %v887
      %v889 = vlaneseq
      %v890 = vshrl.u32 %v889, 7
      %v891 = vsub.s32 2, %v890
      %v892 = vrot.slane %v877, %v891
      %v893 = vlaneseq
      %v894 = vshrl.u32 %v893, 7
      %v895 = vsub.s32 3, %v894
      %v896 = vrot.slane %v877, %v895
      %v897 = vlaneseq
      %v898 = vshrl.u32 %v897, 7
      %v899 = vsub.s32 4, %v898
      %v900 = vrot.slane %v877, %v899
      %v901 = vlaneseq
      %v902 = vshrl.u32 %v901, 7
      %v903 = vsub.s32 5, %v902
      %v904 = vrot.slane %v877, %v903
      %v905 = vlaneseq
      %v906 = vshrl.u32 %v905, 7
      %v907 = vsub.s32 6, %v906
      %v908 = vrot.slane %v877, %v907
      %v909 = vlaneseq
      %v910 = vshrl.u32 %v909, 7
      %v911 = vsub.s32 7, %v910
      %v912 = vrot.slane %v877, %v911
      %v913 = vlaneseq
      %v914 = vshrl.u32 %v913, 7
      %v915 = vsub.s32 0, %v914
      %v916 = vrot.slane %v878, %v915
      %v917 = vlaneseq
      %v918 = vshrl.u32 %v917, 7
      %v919 = vsub.s32 1, %v918
      %v920 = vrot.slane %v878, %v919
      %v921 = vlaneseq
      %v922 = vshrl.u32 %v921, 7
      %v923 = vsub.s32 2, %v922
      %v924 = vrot.slane %v878, %v923
      %v925 = vlaneseq
      %v926 = vshrl.u32 %v925, 7
      %v927 = vsub.s32 3, %v926
      %v928 = vrot.slane %v878, %v927
      %vm941 = vcmask 1040384
      %v942 = vsel %vm941, %v884, 0.0
      %v943 = vsel %vm941, %v888, 0.0
      %v944 = vadd.f32 %v942, %v943
      %v945 = vsel %vm941, %v892, 0.0
      %v946 = vadd.f32 %v944, %v945
      %v947 = vsel %vm941, %v896, 0.0
      %v948 = vadd.f32 %v946, %v947
      %v949 = vsel %vm941, %v900, 0.0
      %v950 = vadd.f32 %v948, %v949
      %v951 = vsel %vm941, %v904, 0.0
      %v952 = vadd.f32 %v950, %v951
      %v953 = vsel %vm941, %v908, 0.0
      %v954 = vadd.f32 %v952, %v953
      %v955 = vsel %vm941, %v912, 0.0
      %v956 = vadd.f32 %v954, %v955
      %v957 = vsel %vm941, %v916, 0.0
      %v958 = vadd.f32 %v956, %v957
      %v959 = vsel %vm941, %v920, 0.0
      %v960 = vadd.f32 %v958, %v959
      %v961 = vsel %vm941, %v924, 0.0
      %v962 = vadd.f32 %v960, %v961
      %v963 = vsel %vm941, %v928, 0.0
      %v964 = vadd.f32 %v962, %v963
      %965 = vadd.xlane.f32.xlu0 %v964
      %v966 = vpop.xlane.xlu0 %965
      %v967 = vrot.slane %v966, 4
      %v968 = vadd.f32 %v966, %v967
      %v969 = vrot.slane %v968, 2
      %v970 = vadd.f32 %v968, %v969
      %v971 = vrot.slane %v970, 1
      %v972 = vadd.f32 %v970, %v971
      %s973 = vtos %v972
      %s974 = smul.f32 %s973, 0.00066666666
      %v975 = vstv %s974
      %976 = vst [vmem:[#allocation8] sm:$0x1] %v975
    $region29: #{loss.1} parent=1 // pred_fallthru
      _
    // Predicated region
    $region30: #{loss.1} parent=1 // pred_check
      _
    $region31: #{loss.1} parent=1 // pred_check_branch
      %978 = sbr.rel (0) target = $region33
    $region32: #{loss.1} parent=1 // pred_region
      %s980 = ssub.s32 16, 16
      %981 = vsyncadd [#allocation5], %s980
      %s983 = sshll.u32 [#allocation8], 4
      %s984 = int_to_ptr.vmem [resolvable:$true] %s983
      %986 = dma.vmem_to_hbm [thread:$0]  %s984, 16, %s3, [#allocation5]
    $region33: #{loss.1} parent=1 // pred_fallthru
      _
    // Predicated region
    $region34: #{loss.1} parent=1 // pred_check
      _
    $region35: #{loss.1} parent=1 // pred_check_branch
      %988 = sbr.rel (0) target = $region37
    $region36: #{loss.1} parent=1 // pred_region
      %989 = dma.done [#allocation5], 16
    $region37: #{loss.1} parent=1 // pred_fallthru
      _
    %990 = vsyncpa [#allocation4], 1
    %991 = vsyncpa [#allocation7], 1
    %992 = vsyncpa [#allocation5], 1

</llo_original>
